<compile_context>
chip_gen: v6e
topology: v6e:2x2x1
jax: 0.10.0
libtpu: 0.0.40
codegen_flags: <defaults>
</compile_context>

<pallas_src>
import jax
import jax.numpy as jnp
from jax.experimental import pallas as pl
from jax.experimental.pallas import tpu as pltpu

STATE_DIM = 8
ACTION_DIM = 4
HIDDEN = 256
OUT_PAD = 128          # lane-dense padded output / fc3 width
MAX_TILE_M = 1024      # big tiles amortize per-grid-step overhead
BATCH = 2


def actor_kernel(x_ref, w1_ref, b1_ref, w2_ref, b2_ref, w3_ref, b3_ref, o_ref):
    # fc1 + relu  (bf16 MXU inputs, f32 accumulation, f32 epilogue)
    x = x_ref[...].astype(jnp.bfloat16)
    h1 = jnp.dot(x, w1_ref[...], preferred_element_type=jnp.float32) + b1_ref[...]
    h1 = jnp.maximum(h1, 0.0)
    # fc2 + relu
    h2 = jnp.dot(h1.astype(jnp.bfloat16), w2_ref[...],
                 preferred_element_type=jnp.float32) + b2_ref[...]
    h2 = jnp.maximum(h2, 0.0)
    # fc3 + tanh  (lane-padded to OUT_PAD=128 -> unmasked full-width store, bf16 writeback)
    h3 = jnp.dot(h2.astype(jnp.bfloat16), w3_ref[...],
                 preferred_element_type=jnp.float32) + b3_ref[...]
    o_ref[...] = jnp.tanh(h3).astype(o_ref.dtype)


def _choose_tile_m(B):
    """Pick the batch tile.

    - B <= 32: single small tile (latency path; avoid padding tiny batches to 256+ rows).
    - else: at least 2 grid steps (keeps both v7x TensorCores busy), tiles capped at
      MAX_TILE_M rows to amortize per-grid-step overhead. Tiles are multiples of 16 so
      both f32 (8-sublane) and bf16 (16-sublane packed) blocks tile cleanly.
    """
    if B <= 32:
        return max(16, ((B + 15) // 16) * 16)
    half = (B + 1) // 2
    tile = ((half + 15) // 16) * 16
    return min(tile, MAX_TILE_M)


def actor_forward(x, params):
    """x: [B, STATE_DIM] f32. Returns [B, ACTION_DIM] f32."""
    w1, b1, w2, b2, w3p, b3p = params
    B = x.shape[0]
    tile_m = _choose_tile_m(B)
    Bp = pl.cdiv(B, tile_m) * tile_m
    if Bp != B:
        x = jnp.pad(x, ((0, Bp - B), (0, 0)))

    out = pl.pallas_call(
        actor_kernel,
        out_shape=jax.ShapeDtypeStruct((Bp, OUT_PAD), jnp.bfloat16),
        grid=(Bp // tile_m,),
        in_specs=[
            # activations: one batch tile per grid step (double-buffered by Pallas)
            pl.BlockSpec((tile_m, STATE_DIM), lambda i: (i, 0)),
            # weights/biases: constant block index -> fetched once, VMEM-resident
            pl.BlockSpec((STATE_DIM, HIDDEN), lambda i: (0, 0)),
            pl.BlockSpec((1, HIDDEN), lambda i: (0, 0)),
            pl.BlockSpec((HIDDEN, HIDDEN), lambda i: (0, 0)),
            pl.BlockSpec((1, HIDDEN), lambda i: (0, 0)),
            pl.BlockSpec((HIDDEN, OUT_PAD), lambda i: (0, 0)),
            pl.BlockSpec((1, OUT_PAD), lambda i: (0, 0)),
        ],
        out_specs=pl.BlockSpec((tile_m, OUT_PAD), lambda i: (i, 0)),
        compiler_params=pltpu.CompilerParams(
            dimension_semantics=("parallel",),
            # sized for v7x's 64 MiB physical VMEM; footprint here is < 2 MiB
            vmem_limit_bytes=32 * 1024 * 1024,
        ),
    )(x, w1, b1, w2, b2, w3p, b3p)

    # slice off padded rows / padded lanes; cast the tiny useful region back to f32
    return out[:B, :ACTION_DIM].astype(jnp.float32)


def init_params(key):
    """PyTorch nn.Linear default init: U(-1/sqrt(fan_in), 1/sqrt(fan_in)).

    Weights are stored as [in, out] (transposed vs. PyTorch [out, in]) in bf16;
    biases stay f32. fc3 weight/bias are zero-padded from ACTION_DIM to OUT_PAD lanes.
    """
    def linear(key, fan_in, fan_out):
        kw, kb = jax.random.split(key)
        bound = 1.0 / jnp.sqrt(fan_in)
        w = jax.random.uniform(kw, (fan_in, fan_out), jnp.float32, -bound, bound)
        b = jax.random.uniform(kb, (1, fan_out), jnp.float32, -bound, bound)
        return w, b

    k1, k2, k3 = jax.random.split(key, 3)
    w1, b1 = linear(k1, STATE_DIM, HIDDEN)
    w2, b2 = linear(k2, HIDDEN, HIDDEN)
    w3, b3 = linear(k3, HIDDEN, ACTION_DIM)

    # zero-pad fc3 to a full 128-lane tile
    w3p = jnp.zeros((HIDDEN, OUT_PAD), jnp.float32).at[:, :ACTION_DIM].set(w3)
    b3p = jnp.zeros((1, OUT_PAD), jnp.float32).at[:, :ACTION_DIM].set(b3)

    return (w1.astype(jnp.bfloat16), b1,
            w2.astype(jnp.bfloat16), b2,
            w3p.astype(jnp.bfloat16), b3p)


def actor_reference(x, params):
    """Pure-JAX reference mirroring the bf16-weight / f32-accumulate / bf16-store numerics."""
    w1, b1, w2, b2, w3p, b3p = params
    h1 = jnp.maximum(
        jnp.dot(x.astype(jnp.bfloat16), w1, preferred_element_type=jnp.float32) + b1, 0.0)
    h2 = jnp.maximum(
        jnp.dot(h1.astype(jnp.bfloat16), w2, preferred_element_type=jnp.float32) + b2, 0.0)
    h3 = jnp.dot(h2.astype(jnp.bfloat16), w3p, preferred_element_type=jnp.float32) + b3p
    out = jnp.tanh(h3).astype(jnp.bfloat16).astype(jnp.float32)
    return out[:, :ACTION_DIM]


if __name__ == "__main__":
    key = jax.random.PRNGKey(0)
    kx, kp, kx2 = jax.random.split(key, 3)
    params = init_params(kp)

    # Small demo batch (module-consistent shapes): tiny-batch latency path (single 16-row tile).
    x = jax.random.normal(kx, (BATCH, STATE_DIM), jnp.float32)
    out = jax.block_until_ready(actor_forward(x, params))
    ref = actor_reference(x, params)
    assert out.shape == (BATCH, ACTION_DIM)
    assert jnp.allclose(out, ref, atol=3e-3, rtol=3e-3), "mismatch vs reference (small batch)"

    # Larger batch: exercises >= 2 parallel grid steps + batch padding (amortized weight DMA).
    x2 = jax.random.normal(kx2, (300, STATE_DIM), jnp.float32)
    out2 = jax.block_until_ready(actor_forward(x2, params))
    ref2 = actor_reference(x2, params)
    assert out2.shape == (300, ACTION_DIM)
    assert jnp.allclose(out2, ref2, atol=3e-3, rtol=3e-3), "mismatch vs reference (batched)"

    print("KERNEL_OK")
</pallas_src>

<mosaic_0001>
module attributes {stable_mosaic.version = 11 : i64} {
  func.func @actor_kernel(%arg0: i32, %arg1: memref<16x8xf32, #tpu.memory_space<vmem>>, %arg2: memref<8x256xbf16, #tpu.memory_space<vmem>>, %arg3: memref<1x256xf32, #tpu.memory_space<vmem>>, %arg4: memref<256x256xbf16, #tpu.memory_space<vmem>>, %arg5: memref<1x256xf32, #tpu.memory_space<vmem>>, %arg6: memref<256x128xbf16, #tpu.memory_space<vmem>>, %arg7: memref<1x128xf32, #tpu.memory_space<vmem>>, %arg8: memref<16x128xbf16, #tpu.memory_space<vmem>>) attributes {dimension_semantics = [#tpu.dimension_semantics<parallel>], iteration_bounds = array<i64: 1>, scalar_prefetch = 0 : i64, scratch_operands = 0 : i64, tpu.core_type = #tpu.core_type<tc>, window_params = [{transform_indices = @transform_0, window_bounds = array<i64: 16, 8>}, {pipeline_mode = #tpu.pipeline_mode<synchronous>, transform_indices = @transform_1, window_bounds = array<i64: 8, 256>}, {pipeline_mode = #tpu.pipeline_mode<synchronous>, transform_indices = @transform_2, window_bounds = array<i64: 1, 256>}, {pipeline_mode = #tpu.pipeline_mode<synchronous>, transform_indices = @transform_3, window_bounds = array<i64: 256, 256>}, {pipeline_mode = #tpu.pipeline_mode<synchronous>, transform_indices = @transform_4, window_bounds = array<i64: 1, 256>}, {pipeline_mode = #tpu.pipeline_mode<synchronous>, transform_indices = @transform_5, window_bounds = array<i64: 256, 128>}, {pipeline_mode = #tpu.pipeline_mode<synchronous>, transform_indices = @transform_6, window_bounds = array<i64: 1, 128>}, {transform_indices = @transform_7, window_bounds = array<i64: 16, 128>}]} {
    %c0 = arith.constant 0 : index
    %c0_0 = arith.constant 0 : index
    %0 = vector.load %arg1[%c0, %c0_0] : memref<16x8xf32, #tpu.memory_space<vmem>>, vector<16x8xf32>
    %1 = arith.truncf %0 : vector<16x8xf32> to vector<16x8xbf16>
    %c0_1 = arith.constant 0 : index
    %c0_2 = arith.constant 0 : index
    %2 = vector.load %arg2[%c0_1, %c0_2] : memref<8x256xbf16, #tpu.memory_space<vmem>>, vector<8x256xbf16>
    %cst = arith.constant dense<0.000000e+00> : vector<16x256xf32>
    %3 = tpu.matmul %1, %2, %cst {dimension_numbers = #tpu.dot_dimension_numbers<[1], [0], [0], [1], [0, 0, 1, 1], [], []>} : vector<16x8xbf16>, vector<8x256xbf16>, vector<16x256xf32> -> vector<16x256xf32>
    %c0_3 = arith.constant 0 : index
    %c0_4 = arith.constant 0 : index
    %4 = vector.load %arg3[%c0_3, %c0_4] : memref<1x256xf32, #tpu.memory_space<vmem>>, vector<1x256xf32>
    %5 = vector.broadcast %4 : vector<1x256xf32> to vector<16x256xf32>
    %6 = arith.addf %3, %5 : vector<16x256xf32>
    %cst_5 = arith.constant 0.000000e+00 : f32
    %7 = vector.broadcast %cst_5 : f32 to vector<16x256xf32>
    %8 = arith.maximumf %6, %7 : vector<16x256xf32>
    %9 = arith.truncf %8 : vector<16x256xf32> to vector<16x256xbf16>
    %c0_6 = arith.constant 0 : index
    %c0_7 = arith.constant 0 : index
    %10 = vector.load %arg4[%c0_6, %c0_7] : memref<256x256xbf16, #tpu.memory_space<vmem>>, vector<256x256xbf16>
    %cst_8 = arith.constant dense<0.000000e+00> : vector<16x256xf32>
    %11 = tpu.matmul %9, %10, %cst_8 {dimension_numbers = #tpu.dot_dimension_numbers<[1], [0], [0], [1], [0, 0, 1, 1], [], []>} : vector<16x256xbf16>, vector<256x256xbf16>, vector<16x256xf32> -> vector<16x256xf32>
    %c0_9 = arith.constant 0 : index
    %c0_10 = arith.constant 0 : index
    %12 = vector.load %arg5[%c0_9, %c0_10] : memref<1x256xf32, #tpu.memory_space<vmem>>, vector<1x256xf32>
    %13 = vector.broadcast %12 : vector<1x256xf32> to vector<16x256xf32>
    %14 = arith.addf %11, %13 : vector<16x256xf32>
    %cst_11 = arith.constant 0.000000e+00 : f32
    %15 = vector.broadcast %cst_11 : f32 to vector<16x256xf32>
    %16 = arith.maximumf %14, %15 : vector<16x256xf32>
    %17 = arith.truncf %16 : vector<16x256xf32> to vector<16x256xbf16>
    %c0_12 = arith.constant 0 : index
    %c0_13 = arith.constant 0 : index
    %18 = vector.load %arg6[%c0_12, %c0_13] : memref<256x128xbf16, #tpu.memory_space<vmem>>, vector<256x128xbf16>
    %cst_14 = arith.constant dense<0.000000e+00> : vector<16x128xf32>
    %19 = tpu.matmul %17, %18, %cst_14 {dimension_numbers = #tpu.dot_dimension_numbers<[1], [0], [0], [1], [0, 0, 1, 1], [], []>} : vector<16x256xbf16>, vector<256x128xbf16>, vector<16x128xf32> -> vector<16x128xf32>
    %c0_15 = arith.constant 0 : index
    %c0_16 = arith.constant 0 : index
    %20 = vector.load %arg7[%c0_15, %c0_16] : memref<1x128xf32, #tpu.memory_space<vmem>>, vector<1x128xf32>
    %21 = vector.broadcast %20 : vector<1x128xf32> to vector<16x128xf32>
    %22 = arith.addf %19, %21 : vector<16x128xf32>
    %23 = math.tanh %22 : vector<16x128xf32>
    %24 = arith.truncf %23 : vector<16x128xf32> to vector<16x128xbf16>
    %c0_17 = arith.constant 0 : index
    %c0_18 = arith.constant 0 : index
    %25 = vector.load %arg8[%c0_17, %c0_18] : memref<16x128xbf16, #tpu.memory_space<vmem>>, vector<16x128xbf16>
    tpu.vector_store %arg8[%c0_17, %c0_18], %24 {strides = array<i32>} : memref<16x128xbf16, #tpu.memory_space<vmem>>, vector<16x128xbf16>,
    return
  }
  func.func @transform_0(%arg0: i32) -> (i32, i32) {
    %c0_i32 = arith.constant 0 : i32
    %c0_i32_0 = arith.constant 0 : i32
    return %arg0, %c0_i32 : i32, i32
  }
  func.func @transform_1(%arg0: i32) -> (i32, i32) {
    %c0_i32 = arith.constant 0 : i32
    %c0_i32_0 = arith.constant 0 : i32
    %c0_i32_1 = arith.constant 0 : i32
    return %c0_i32, %c0_i32_0 : i32, i32
  }
  func.func @transform_2(%arg0: i32) -> (i32, i32) {
    %c0_i32 = arith.constant 0 : i32
    %c0_i32_0 = arith.constant 0 : i32
    %c0_i32_1 = arith.constant 0 : i32
    return %c0_i32, %c0_i32_0 : i32, i32
  }
  func.func @transform_3(%arg0: i32) -> (i32, i32) {
    %c0_i32 = arith.constant 0 : i32
    %c0_i32_0 = arith.constant 0 : i32
    %c0_i32_1 = arith.constant 0 : i32
    return %c0_i32, %c0_i32_0 : i32, i32
  }
  func.func @transform_4(%arg0: i32) -> (i32, i32) {
    %c0_i32 = arith.constant 0 : i32
    %c0_i32_0 = arith.constant 0 : i32
    %c0_i32_1 = arith.constant 0 : i32
    return %c0_i32, %c0_i32_0 : i32, i32
  }
  func.func @transform_5(%arg0: i32) -> (i32, i32) {
    %c0_i32 = arith.constant 0 : i32
    %c0_i32_0 = arith.constant 0 : i32
    %c0_i32_1 = arith.constant 0 : i32
    return %c0_i32, %c0_i32_0 : i32, i32
  }
  func.func @transform_6(%arg0: i32) -> (i32, i32) {
    %c0_i32 = arith.constant 0 : i32
    %c0_i32_0 = arith.constant 0 : i32
    %c0_i32_1 = arith.constant 0 : i32
    return %c0_i32, %c0_i32_0 : i32, i32
  }
  func.func @transform_7(%arg0: i32) -> (i32, i32) {
    %c0_i32 = arith.constant 0 : i32
    %c0_i32_0 = arith.constant 0 : i32
    return %arg0, %c0_i32 : i32, i32
  }
}

</mosaic_0001>

<llo_original>
// kernel: tpu_custom_call.1
$region0: #{tpu_custom_call.1}
  #allocation0 [shape = 'u32[]', space=smem, size = 0x4, offset = 0x4, fixed_abs, tag = 'smem constant byte address 0x4 - core index']
  #allocation1 [shape = 'u32[144,128]{1,0:T(1,128)}', space=vmem, size = 0x12000, scoped, tag = 'internal scratch']
  %s0 = inlined_call_operand.vmem [shape: f32[16,8], index: 0, kind: input, shape index: {}]
  %s1 = inlined_call_operand.vmem [shape: bf16[8,256], index: 1, kind: input, shape index: {}]
  %s2 = inlined_call_operand.vmem [shape: f32[1,256], index: 2, kind: input, shape index: {}]
  %s3 = inlined_call_operand.hbm [shape: bf16[256,256], index: 3, kind: input, shape index: {}]
  %s4 = inlined_call_operand.vmem [shape: f32[1,256], index: 4, kind: input, shape index: {}]
  %s5 = inlined_call_operand.hbm [shape: bf16[256,128], index: 5, kind: input, shape index: {}]
  %s6 = inlined_call_operand.vmem [shape: f32[1,128], index: 6, kind: input, shape index: {}]
  %s7 = inlined_call_operand.hbm [shape: bf16[16,128], index: 7, kind: output, shape index: {}]
  %s8 = sld [smem:[#allocation0]]
  $region46: #{tpu_custom_call.1} parent=0
    _
  %s10 = ssub.s32 1, %s8
  %s11 = scalar_select 0, %s10, %s8
  $region1: #{tpu_custom_call.1} parent=0
    #allocation2 [shape = 'u8[131072]{0}', space=vmem, size = 0x20000, scoped, tag = 'input window, operand 3, single buffered']
    #allocation3 [shape = 's32[1]{0}', space=sflag, size = 0x4, scoped, tag = 'scoped memory for tpu_custom_call.1']
    #allocation4 [shape = 's32[1]{0}', space=sflag, size = 0x4, scoped, tag = 'scoped memory for tpu_custom_call.1']
    #allocation5 [shape = 'u8[65536]{0}', space=vmem, size = 0x10000, scoped, tag = 'input window, operand 5, single buffered']
    #allocation6 [shape = 's32[1]{0}', space=sflag, size = 0x4, scoped, tag = 'scoped memory for tpu_custom_call.1']
    #allocation7 [shape = 'u8[4096]{0}', space=vmem, size = 0x1000, scoped, tag = 'output window, operand 0, single buffered']
    %12 = vsyncpa [#allocation3], 0
    %13 = vsyncpa [#allocation6], 0
    %14 = vsyncpa [#allocation4], 0
    // Predicated region
    $region2: #{tpu_custom_call.1} parent=1 // pred_check
      _
    $region3: #{tpu_custom_call.1} parent=1 // pred_check_branch
      %16 = sbr.rel (0) target = $region5
    $region4: #{tpu_custom_call.1} parent=1 // pred_region
      _
    $region5: #{tpu_custom_call.1} parent=1 // pred_fallthru
      _
    // Predicated region
    $region6: #{tpu_custom_call.1} parent=1 // pred_check
      _
    $region7: #{tpu_custom_call.1} parent=1 // pred_check_branch
      %18 = sbr.rel (0) target = $region9
    $region8: #{tpu_custom_call.1} parent=1 // pred_region
      _
    $region9: #{tpu_custom_call.1} parent=1 // pred_fallthru
      _
    // Predicated region
    $region10: #{tpu_custom_call.1} parent=1 // pred_check
      _
    $region11: #{tpu_custom_call.1} parent=1 // pred_check_branch
      %20 = sbr.rel (0) target = $region13
    $region12: #{tpu_custom_call.1} parent=1 // pred_region
      _
    $region13: #{tpu_custom_call.1} parent=1 // pred_fallthru
      _
    // Predicated region
    $region14: #{tpu_custom_call.1} parent=1 // pred_check
      _
    $region15: #{tpu_custom_call.1} parent=1 // pred_check_branch
      %22 = sbr.rel (0) target = $region17
    $region16: #{tpu_custom_call.1} parent=1 // pred_region
      %s24 = ssub.s32 4096, 4096
      %25 = vsyncadd [#allocation3], %s24
      %s26 = sshll.u32 [#allocation2], 4
      %s27 = int_to_ptr.vmem [resolvable:$true] %s26
      %32 = dma.hbm_to_vmem [thread:$0]  %s3, 4096, %s27, [#allocation3], 128, 128, 8
    $region17: #{tpu_custom_call.1} parent=1 // pred_fallthru
      _
    // Predicated region
    $region18: #{tpu_custom_call.1} parent=1 // pred_check
      _
    $region19: #{tpu_custom_call.1} parent=1 // pred_check_branch
      %34 = sbr.rel (0) target = $region21
    $region20: #{tpu_custom_call.1} parent=1 // pred_region
      _
    $region21: #{tpu_custom_call.1} parent=1 // pred_fallthru
      _
    // Predicated region
    $region22: #{tpu_custom_call.1} parent=1 // pred_check
      _
    $region23: #{tpu_custom_call.1} parent=1 // pred_check_branch
      %36 = sbr.rel (0) target = $region25
    $region24: #{tpu_custom_call.1} parent=1 // pred_region
      %s38 = ssub.s32 2048, 2048
      %39 = vsyncadd [#allocation6], %s38
      %s40 = sshll.u32 [#allocation5], 4
      %s41 = int_to_ptr.vmem [resolvable:$true] %s40
      %46 = dma.hbm_to_vmem [thread:$0]  %s5, 2048, %s41, [#allocation6], 64, 64, 4
    $region25: #{tpu_custom_call.1} parent=1 // pred_fallthru
      _
    // Predicated region
    $region26: #{tpu_custom_call.1} parent=1 // pred_check
      _
    $region27: #{tpu_custom_call.1} parent=1 // pred_check_branch
      %48 = sbr.rel (0) target = $region29
    $region28: #{tpu_custom_call.1} parent=1 // pred_region
      _
    $region29: #{tpu_custom_call.1} parent=1 // pred_fallthru
      _
    // Predicated region
    $region30: #{tpu_custom_call.1} parent=1 // pred_check
      _
    $region31: #{tpu_custom_call.1} parent=1 // pred_check_branch
      %50 = sbr.rel (0) target = $region33
    $region32: #{tpu_custom_call.1} parent=1 // pred_region
      %51 = dma.done [#allocation3], 4096
    $region33: #{tpu_custom_call.1} parent=1 // pred_fallthru
      _
    // Predicated region
    $region34: #{tpu_custom_call.1} parent=1 // pred_check
      _
    $region35: #{tpu_custom_call.1} parent=1 // pred_check_branch
      %53 = sbr.rel (0) target = $region37
    $region36: #{tpu_custom_call.1} parent=1 // pred_region
      %54 = dma.done [#allocation6], 2048
    $region37: #{tpu_custom_call.1} parent=1 // pred_fallthru
      _
    %v56 = vld [vmem:[%s0] sm:$0xff]
    %v57 = vld [vmem:[%s0 + $0x8] sm:$0xff]
    %v58 = vpack.c.bf16 %v57, %v56
    %v59 = vld [vmem:[%s1] sm:$0xff]
    %v60 = vld [vmem:[%s2] sm:$0x3]
    %v62 = vlaneseq
    %v63 = vshrl.u32 %v62, 7
    %v64 = vsub.s32 0, %v63
    %v65 = vrot.slane %v60, %v64
    %v66 = vlaneseq
    %v67 = vshrl.u32 %v66, 7
    %v68 = vsub.s32 1, %v67
    %v69 = vrot.slane %v60, %v68
    %v73 = vunpack.c.l.b16 %v59
    %v74 = vunpack.c.h.b16 %v59
    %v75 = vpack.c.b16 %v73, %v73
    %v76 = vpack.c.b16 %v74, %v74
    %vm77 = vcmask 64512
    %v79 = vsel %vm77, %v58, 0
    %vm81 = vcmask 1043456
    %v83 = vsel %vm81, %v75, 0
    %v86 = vsel %vm81, %v76, 0
    %88 = vmatprep.subr.bf16.mxu0 0
    %89 = vmatpush1.bf16.msra.mxu0 0
    %90 = vmatprep.subr.bf16.mxu0 0
    %91 = vmatpush1.bf16.msra.mxu0 0
    %92 = vmatprep.subr.bf16.mxu0 0
    %93 = vmatpush1.bf16.msra.mxu0 0
    %94 = vmatprep.subr.bf16.mxu0 0
    %95 = vmatpush1.bf16.msra.mxu0 0
    %96 = vmatprep.subr.bf16.mxu0 0
    %97 = vmatpush1.bf16.msra.mxu0 0
    %98 = vmatprep.subr.bf16.mxu0 0
    %99 = vmatpush1.bf16.msra.mxu0 0
    %100 = vmatprep.subr.bf16.mxu0 0
    %101 = vmatpush1.bf16.msra.mxu0 0
    %102 = vmatprep.subr.bf16.mxu0 %v86
    %103 = vmatpush1.bf16.msra.mxu0 %v83
    %104 = vmatprep.subr.bf16.mxu0 0
    %105 = vmatpush2.bf16.msra.mxu0 0
    %106 = vmatprep.subr.bf16.mxu0 0
    %107 = vmatpush2.bf16.msra.mxu0 0
    %108 = vmatprep.subr.bf16.mxu0 0
    %109 = vmatpush2.bf16.msra.mxu0 0
    %110 = vmatprep.subr.bf16.mxu0 0
    %111 = vmatpush2.bf16.msra.mxu0 0
    %112 = vmatprep.subr.bf16.mxu0 0
    %113 = vmatpush2.bf16.msra.mxu0 0
    %114 = vmatprep.subr.bf16.mxu0 0
    %115 = vmatpush2.bf16.msra.mxu0 0
    %116 = vmatprep.subr.bf16.mxu0 0
    %117 = vmatpush2.bf16.msra.mxu0 0
    %118 = vmatprep.subr.bf16.mxu0 0
    %119 = vmatpush2.bf16.msra.mxu0 0
    %120 = vmatprep.mubr.bf16.mxu0 0
    %121 = vmatmul.mubr.bf16.gmra.mxu0 %v79
    %v122 = vpop.f32.mrf.mxu0
    %v123 = vadd.f32 %v65, %v122
    %v124 = vpop.f32.mrf.mxu0
    %v125 = vadd.f32 %v69, %v124
    %v126 = vpop.f32.mrf.mxu0
    %v127 = vadd.f32 %v65, %v126
    %v128 = vpop.f32.mrf.mxu0
    %v129 = vadd.f32 %v69, %v128
    %130 = vdwg.mxu0
    %v131 = vmax.f32 %v123, 0.0
    %v132 = vmax.f32 %v125, 0.0
    %v133 = vmax.f32 %v127, 0.0
    %v134 = vmax.f32 %v129, 0.0
    %v135 = vpack.c.bf16 %v133, %v131
    %v136 = vpack.c.bf16 %v134, %v132
    %v137 = vld [vmem:[#allocation2] sm:$0xff]
    %v138 = vld [vmem:[#allocation2 + $0x8] sm:$0xff]
    %v139 = vld [vmem:[#allocation2 + $0x10] sm:$0xff]
    %v140 = vld [vmem:[#allocation2 + $0x18] sm:$0xff]
    %v141 = vld [vmem:[#allocation2 + $0x20] sm:$0xff]
    %v142 = vld [vmem:[#allocation2 + $0x28] sm:$0xff]
    %v143 = vld [vmem:[#allocation2 + $0x30] sm:$0xff]
    %v144 = vld [vmem:[#allocation2 + $0x38] sm:$0xff]
    %v145 = vld [vmem:[#allocation2 + $0x40] sm:$0xff]
    %v146 = vld [vmem:[#allocation2 + $0x48] sm:$0xff]
    %v147 = vld [vmem:[#allocation2 + $0x50] sm:$0xff]
    %v148 = vld [vmem:[#allocation2 + $0x58] sm:$0xff]
    %v149 = vld [vmem:[#allocation2 + $0x60] sm:$0xff]
    %v150 = vld [vmem:[#allocation2 + $0x68] sm:$0xff]
    %v151 = vld [vmem:[#allocation2 + $0x70] sm:$0xff]
    %v152 = vld [vmem:[#allocation2 + $0x78] sm:$0xff]
    %v153 = vld [vmem:[#allocation2 + $0x80] sm:$0xff]
    %v154 = vld [vmem:[#allocation2 + $0x88] sm:$0xff]
    %v155 = vld [vmem:[#allocation2 + $0x90] sm:$0xff]
    %v156 = vld [vmem:[#allocation2 + $0x98] sm:$0xff]
    %v157 = vld [vmem:[#allocation2 + $0xa0] sm:$0xff]
    %v158 = vld [vmem:[#allocation2 + $0xa8] sm:$0xff]
    %v159 = vld [vmem:[#allocation2 + $0xb0] sm:$0xff]
    %v160 = vld [vmem:[#allocation2 + $0xb8] sm:$0xff]
    %v161 = vld [vmem:[#allocation2 + $0xc0] sm:$0xff]
    %v162 = vld [vmem:[#allocation2 + $0xc8] sm:$0xff]
    %v163 = vld [vmem:[#allocation2 + $0xd0] sm:$0xff]
    %v164 = vld [vmem:[#allocation2 + $0xd8] sm:$0xff]
    %v165 = vld [vmem:[#allocation2 + $0xe0] sm:$0xff]
    %v166 = vld [vmem:[#allocation2 + $0xe8] sm:$0xff]
    %v167 = vld [vmem:[#allocation2 + $0xf0] sm:$0xff]
    %v168 = vld [vmem:[#allocation2 + $0xf8] sm:$0xff]
    %v169 = vld [vmem:[%s4] sm:$0x3]
    %v171 = vlaneseq
    %v172 = vshrl.u32 %v171, 7
    %v173 = vsub.s32 0, %v172
    %v174 = vrot.slane %v169, %v173
    %v175 = vlaneseq
    %v176 = vshrl.u32 %v175, 7
    %v177 = vsub.s32 1, %v176
    %v178 = vrot.slane %v169, %v177
    %v213 = vunpack.c.l.b16 %v137
    %v214 = vunpack.c.h.b16 %v137
    %v215 = vunpack.c.l.b16 %v138
    %v216 = vunpack.c.h.b16 %v138
    %v217 = vunpack.c.l.b16 %v139
    %v218 = vunpack.c.h.b16 %v139
    %v219 = vunpack.c.l.b16 %v140
    %v220 = vunpack.c.h.b16 %v140
    %v221 = vunpack.c.l.b16 %v141
    %v222 = vunpack.c.h.b16 %v141
    %v223 = vunpack.c.l.b16 %v142
    %v224 = vunpack.c.h.b16 %v142
    %v225 = vunpack.c.l.b16 %v143
    %v226 = vunpack.c.h.b16 %v143
    %v227 = vunpack.c.l.b16 %v144
    %v228 = vunpack.c.h.b16 %v144
    %v229 = vunpack.c.l.b16 %v145
    %v230 = vunpack.c.h.b16 %v145
    %v231 = vunpack.c.l.b16 %v146
    %v232 = vunpack.c.h.b16 %v146
    %v233 = vunpack.c.l.b16 %v147
    %v234 = vunpack.c.h.b16 %v147
    %v235 = vunpack.c.l.b16 %v148
    %v236 = vunpack.c.h.b16 %v148
    %v237 = vunpack.c.l.b16 %v149
    %v238 = vunpack.c.h.b16 %v149
    %v239 = vunpack.c.l.b16 %v150
    %v240 = vunpack.c.h.b16 %v150
    %v241 = vunpack.c.l.b16 %v151
    %v242 = vunpack.c.h.b16 %v151
    %v243 = vunpack.c.l.b16 %v152
    %v244 = vunpack.c.h.b16 %v152
    %v245 = vunpack.c.l.b16 %v153
    %v246 = vunpack.c.h.b16 %v153
    %v247 = vunpack.c.l.b16 %v154
    %v248 = vunpack.c.h.b16 %v154
    %v249 = vunpack.c.l.b16 %v155
    %v250 = vunpack.c.h.b16 %v155
    %v251 = vunpack.c.l.b16 %v156
    %v252 = vunpack.c.h.b16 %v156
    %v253 = vunpack.c.l.b16 %v157
    %v254 = vunpack.c.h.b16 %v157
    %v255 = vunpack.c.l.b16 %v158
    %v256 = vunpack.c.h.b16 %v158
    %v257 = vunpack.c.l.b16 %v159
    %v258 = vunpack.c.h.b16 %v159
    %v259 = vunpack.c.l.b16 %v160
    %v260 = vunpack.c.h.b16 %v160
    %v261 = vunpack.c.l.b16 %v161
    %v262 = vunpack.c.h.b16 %v161
    %v263 = vunpack.c.l.b16 %v162
    %v264 = vunpack.c.h.b16 %v162
    %v265 = vunpack.c.l.b16 %v163
    %v266 = vunpack.c.h.b16 %v163
    %v267 = vunpack.c.l.b16 %v164
    %v268 = vunpack.c.h.b16 %v164
    %v269 = vunpack.c.l.b16 %v165
    %v270 = vunpack.c.h.b16 %v165
    %v271 = vunpack.c.l.b16 %v166
    %v272 = vunpack.c.h.b16 %v166
    %v273 = vunpack.c.l.b16 %v167
    %v274 = vunpack.c.h.b16 %v167
    %v275 = vunpack.c.l.b16 %v168
    %v276 = vunpack.c.h.b16 %v168
    %v277 = vpack.c.b16 %v215, %v213
    %v278 = vpack.c.b16 %v216, %v214
    %v279 = vpack.c.b16 %v219, %v217
    %v280 = vpack.c.b16 %v220, %v218
    %v281 = vpack.c.b16 %v223, %v221
    %v282 = vpack.c.b16 %v224, %v222
    %v283 = vpack.c.b16 %v227, %v225
    %v284 = vpack.c.b16 %v228, %v226
    %v285 = vpack.c.b16 %v231, %v229
    %v286 = vpack.c.b16 %v232, %v230
    %v287 = vpack.c.b16 %v235, %v233
    %v288 = vpack.c.b16 %v236, %v234
    %v289 = vpack.c.b16 %v239, %v237
    %v290 = vpack.c.b16 %v240, %v238
    %v291 = vpack.c.b16 %v243, %v241
    %v292 = vpack.c.b16 %v244, %v242
    %v293 = vpack.c.b16 %v247, %v245
    %v294 = vpack.c.b16 %v248, %v246
    %v295 = vpack.c.b16 %v251, %v249
    %v296 = vpack.c.b16 %v252, %v250
    %v297 = vpack.c.b16 %v255, %v253
    %v298 = vpack.c.b16 %v256, %v254
    %v299 = vpack.c.b16 %v259, %v257
    %v300 = vpack.c.b16 %v260, %v258
    %v301 = vpack.c.b16 %v263, %v261
    %v302 = vpack.c.b16 %v264, %v262
    %v303 = vpack.c.b16 %v267, %v265
    %v304 = vpack.c.b16 %v268, %v266
    %v305 = vpack.c.b16 %v271, %v269
    %v306 = vpack.c.b16 %v272, %v270
    %v307 = vpack.c.b16 %v275, %v273
    %v308 = vpack.c.b16 %v276, %v274
    %341 = vmatprep.subr.bf16.mxu0 %v292
    %342 = vmatpush1.bf16.msra.mxu0 %v291
    %343 = vmatprep.subr.bf16.mxu0 %v290
    %344 = vmatpush1.bf16.msra.mxu0 %v289
    %345 = vmatprep.subr.bf16.mxu0 %v288
    %346 = vmatpush1.bf16.msra.mxu0 %v287
    %347 = vmatprep.subr.bf16.mxu0 %v286
    %348 = vmatpush1.bf16.msra.mxu0 %v285
    %349 = vmatprep.subr.bf16.mxu0 %v284
    %350 = vmatpush1.bf16.msra.mxu0 %v283
    %351 = vmatprep.subr.bf16.mxu0 %v282
    %352 = vmatpush1.bf16.msra.mxu0 %v281
    %353 = vmatprep.subr.bf16.mxu0 %v280
    %354 = vmatpush1.bf16.msra.mxu0 %v279
    %355 = vmatprep.subr.bf16.mxu0 %v278
    %356 = vmatpush1.bf16.msra.mxu0 %v277
    %357 = vmatprep.subr.bf16.mxu0 %v308
    %358 = vmatpush2.bf16.msra.mxu0 %v307
    %359 = vmatprep.subr.bf16.mxu0 %v306
    %360 = vmatpush2.bf16.msra.mxu0 %v305
    %361 = vmatprep.subr.bf16.mxu0 %v304
    %362 = vmatpush2.bf16.msra.mxu0 %v303
    %363 = vmatprep.subr.bf16.mxu0 %v302
    %364 = vmatpush2.bf16.msra.mxu0 %v301
    %365 = vmatprep.subr.bf16.mxu0 %v300
    %366 = vmatpush2.bf16.msra.mxu0 %v299
    %367 = vmatprep.subr.bf16.mxu0 %v298
    %368 = vmatpush2.bf16.msra.mxu0 %v297
    %369 = vmatprep.subr.bf16.mxu0 %v296
    %370 = vmatpush2.bf16.msra.mxu0 %v295
    %371 = vmatprep.subr.bf16.mxu0 %v294
    %372 = vmatpush2.bf16.msra.mxu0 %v293
    %373 = vmatprep.mubr.bf16.mxu0 %v136
    %374 = vmatmul.mubr.bf16.gmra.mxu0 %v135
    %v375 = vpop.f32.mrf.mxu0
    %v376 = vadd.f32 %v174, %v375
    %v377 = vpop.f32.mrf.mxu0
    %v378 = vadd.f32 %v178, %v377
    %v379 = vpop.f32.mrf.mxu0
    %v380 = vadd.f32 %v174, %v379
    %v381 = vpop.f32.mrf.mxu0
    %v382 = vadd.f32 %v178, %v381
    %383 = vdwg.mxu0
    %v384 = vmax.f32 %v376, 0.0
    %v385 = vmax.f32 %v378, 0.0
    %v386 = vmax.f32 %v380, 0.0
    %v387 = vmax.f32 %v382, 0.0
    %v388 = vpack.c.bf16 %v386, %v384
    %v389 = vpack.c.bf16 %v387, %v385
    %v390 = vld [vmem:[#allocation5] sm:$0xf]
    %v391 = vld [vmem:[#allocation5 + $0x4] sm:$0xf]
    %v392 = vld [vmem:[#allocation5 + $0x8] sm:$0xf]
    %v393 = vld [vmem:[#allocation5 + $0xc] sm:$0xf]
    %v394 = vld [vmem:[#allocation5 + $0x10] sm:$0xf]
    %v395 = vld [vmem:[#allocation5 + $0x14] sm:$0xf]
    %v396 = vld [vmem:[#allocation5 + $0x18] sm:$0xf]
    %v397 = vld [vmem:[#allocation5 + $0x1c] sm:$0xf]
    %v398 = vld [vmem:[#allocation5 + $0x20] sm:$0xf]
    %v399 = vld [vmem:[#allocation5 + $0x24] sm:$0xf]
    %v400 = vld [vmem:[#allocation5 + $0x28] sm:$0xf]
    %v401 = vld [vmem:[#allocation5 + $0x2c] sm:$0xf]
    %v402 = vld [vmem:[#allocation5 + $0x30] sm:$0xf]
    %v403 = vld [vmem:[#allocation5 + $0x34] sm:$0xf]
    %v404 = vld [vmem:[#allocation5 + $0x38] sm:$0xf]
    %v405 = vld [vmem:[#allocation5 + $0x3c] sm:$0xf]
    %v406 = vld [vmem:[#allocation5 + $0x40] sm:$0xf]
    %v407 = vld [vmem:[#allocation5 + $0x44] sm:$0xf]
    %v408 = vld [vmem:[#allocation5 + $0x48] sm:$0xf]
    %v409 = vld [vmem:[#allocation5 + $0x4c] sm:$0xf]
    %v410 = vld [vmem:[#allocation5 + $0x50] sm:$0xf]
    %v411 = vld [vmem:[#allocation5 + $0x54] sm:$0xf]
    %v412 = vld [vmem:[#allocation5 + $0x58] sm:$0xf]
    %v413 = vld [vmem:[#allocation5 + $0x5c] sm:$0xf]
    %v414 = vld [vmem:[#allocation5 + $0x60] sm:$0xf]
    %v415 = vld [vmem:[#allocation5 + $0x64] sm:$0xf]
    %v416 = vld [vmem:[#allocation5 + $0x68] sm:$0xf]
    %v417 = vld [vmem:[#allocation5 + $0x6c] sm:$0xf]
    %v418 = vld [vmem:[#allocation5 + $0x70] sm:$0xf]
    %v419 = vld [vmem:[#allocation5 + $0x74] sm:$0xf]
    %v420 = vld [vmem:[#allocation5 + $0x78] sm:$0xf]
    %v421 = vld [vmem:[#allocation5 + $0x7c] sm:$0xf]
    %v422 = vld [vmem:[%s6] sm:$0x1]
    %v424 = vlaneseq
    %v425 = vshrl.u32 %v424, 7
    %v426 = vsub.s32 0, %v425
    %v427 = vrot.slane %v422, %v426
    %v461 = vunpack.c.l.b16 %v390
    %v462 = vunpack.c.l.b16 %v391
    %v463 = vunpack.c.l.b16 %v392
    %v464 = vunpack.c.l.b16 %v393
    %v465 = vunpack.c.l.b16 %v394
    %v466 = vunpack.c.l.b16 %v395
    %v467 = vunpack.c.l.b16 %v396
    %v468 = vunpack.c.l.b16 %v397
    %v469 = vunpack.c.l.b16 %v398
    %v470 = vunpack.c.l.b16 %v399
    %v471 = vunpack.c.l.b16 %v400
    %v472 = vunpack.c.l.b16 %v401
    %v473 = vunpack.c.l.b16 %v402
    %v474 = vunpack.c.l.b16 %v403
    %v475 = vunpack.c.l.b16 %v404
    %v476 = vunpack.c.l.b16 %v405
    %v477 = vunpack.c.l.b16 %v406
    %v478 = vunpack.c.l.b16 %v407
    %v479 = vunpack.c.l.b16 %v408
    %v480 = vunpack.c.l.b16 %v409
    %v481 = vunpack.c.l.b16 %v410
    %v482 = vunpack.c.l.b16 %v411
    %v483 = vunpack.c.l.b16 %v412
    %v484 = vunpack.c.l.b16 %v413
    %v485 = vunpack.c.l.b16 %v414
    %v486 = vunpack.c.l.b16 %v415
    %v487 = vunpack.c.l.b16 %v416
    %v488 = vunpack.c.l.b16 %v417
    %v489 = vunpack.c.l.b16 %v418
    %v490 = vunpack.c.l.b16 %v419
    %v491 = vunpack.c.l.b16 %v420
    %v492 = vunpack.c.l.b16 %v421
    %v493 = vpack.c.b16 %v462, %v461
    %v494 = vpack.c.b16 %v464, %v463
    %v495 = vpack.c.b16 %v466, %v465
    %v496 = vpack.c.b16 %v468, %v467
    %v497 = vpack.c.b16 %v470, %v469
    %v498 = vpack.c.b16 %v472, %v471
    %v499 = vpack.c.b16 %v474, %v473
    %v500 = vpack.c.b16 %v476, %v475
    %v501 = vpack.c.b16 %v478, %v477
    %v502 = vpack.c.b16 %v480, %v479
    %v503 = vpack.c.b16 %v482, %v481
    %v504 = vpack.c.b16 %v484, %v483
    %v505 = vpack.c.b16 %v486, %v485
    %v506 = vpack.c.b16 %v488, %v487
    %v507 = vpack.c.b16 %v490, %v489
    %v508 = vpack.c.b16 %v492, %v491
    %525 = vmatprep.subr.bf16.mxu0 0
    %526 = vmatpush1.bf16.msra.mxu0 %v500
    %527 = vmatprep.subr.bf16.mxu0 0
    %528 = vmatpush1.bf16.msra.mxu0 %v499
    %529 = vmatprep.subr.bf16.mxu0 0
    %530 = vmatpush1.bf16.msra.mxu0 %v498
    %531 = vmatprep.subr.bf16.mxu0 0
    %532 = vmatpush1.bf16.msra.mxu0 %v497
    %533 = vmatprep.subr.bf16.mxu0 0
    %534 = vmatpush1.bf16.msra.mxu0 %v496
    %535 = vmatprep.subr.bf16.mxu0 0
    %536 = vmatpush1.bf16.msra.mxu0 %v495
    %537 = vmatprep.subr.bf16.mxu0 0
    %538 = vmatpush1.bf16.msra.mxu0 %v494
    %539 = vmatprep.subr.bf16.mxu0 0
    %540 = vmatpush1.bf16.msra.mxu0 %v493
    %541 = vmatprep.subr.bf16.mxu0 0
    %542 = vmatpush2.bf16.msra.mxu0 %v508
    %543 = vmatprep.subr.bf16.mxu0 0
    %544 = vmatpush2.bf16.msra.mxu0 %v507
    %545 = vmatprep.subr.bf16.mxu0 0
    %546 = vmatpush2.bf16.msra.mxu0 %v506
    %547 = vmatprep.subr.bf16.mxu0 0
    %548 = vmatpush2.bf16.msra.mxu0 %v505
    %549 = vmatprep.subr.bf16.mxu0 0
    %550 = vmatpush2.bf16.msra.mxu0 %v504
    %551 = vmatprep.subr.bf16.mxu0 0
    %552 = vmatpush2.bf16.msra.mxu0 %v503
    %553 = vmatprep.subr.bf16.mxu0 0
    %554 = vmatpush2.bf16.msra.mxu0 %v502
    %555 = vmatprep.subr.bf16.mxu0 0
    %556 = vmatpush2.bf16.msra.mxu0 %v501
    %557 = vmatprep.mubr.bf16.mxu0 %v389
    %558 = vmatmul.mubr.bf16.gmra.mxu0 %v388
    %v559 = vpop.f32.mrf.mxu0
    %v560 = vadd.f32 %v427, %v559
    %v561 = vpop.f32.mrf.mxu0
    %v562 = vpop.f32.mrf.mxu0
    %v563 = vadd.f32 %v427, %v562
    %v564 = vpop.f32.mrf.mxu0
    %565 = vdwg.mxu0
    %v566 = vtanh.pop %v560
    %v567 = vtanh.pop %v563
    %v568 = vpack.c.bf16 %v567, %v566
    %v570 = vunpack.c.l.b16 %v568
    %v571 = vunpack.c.h.b16 %v568
    %v572 = vpack.c.b16 %v570, %v570
    %v573 = vpack.c.b16 %v571, %v571
    %576 = vst [vmem:[#allocation7] sm:$0xf] %v572
    %577 = vst [vmem:[#allocation7 + $0x4] sm:$0xf] %v573
    // Predicated region
    $region38: #{tpu_custom_call.1} parent=1 // pred_check
      _
    $region39: #{tpu_custom_call.1} parent=1 // pred_check_branch
      %579 = sbr.rel (0) target = $region41
    $region40: #{tpu_custom_call.1} parent=1 // pred_region
      %s581 = ssub.s32 128, 128
      %582 = vsyncadd [#allocation4], %s581
      %s583 = sshll.u32 [#allocation7], 4
      %s584 = int_to_ptr.vmem [resolvable:$true] %s583
      %589 = dma.vmem_to_hbm [thread:$0]  %s584, 128, %s7, [#allocation4], 64, 64, 4
    $region41: #{tpu_custom_call.1} parent=1 // pred_fallthru
      _
    // Predicated region
    $region42: #{tpu_custom_call.1} parent=1 // pred_check
      _
    $region43: #{tpu_custom_call.1} parent=1 // pred_check_branch
      %591 = sbr.rel (0) target = $region45
    $region44: #{tpu_custom_call.1} parent=1 // pred_region
      %592 = dma.done [#allocation4], 128
    $region45: #{tpu_custom_call.1} parent=1 // pred_fallthru
      _
    %593 = vsyncpa [#allocation3], 1
    %594 = vsyncpa [#allocation6], 1
    %595 = vsyncpa [#allocation4], 1

</llo_original>
